<compile_context>
chip_gen: v7x
topology: tpu7x:2x2x1
jax: 0.10.0
libtpu: 0.0.40
codegen_flags: <defaults>
</compile_context>

<pallas_src>
import numpy as np
import jax
import jax.numpy as jnp
from jax import lax
from jax.experimental import pallas as pl
from jax.experimental.pallas import tpu as pltpu

F32 = jnp.float32
PARENTS = (-1, 0, 1, 1, 1)     # FLAME kinematic tree: global, neck, jaw, eyeL, eyeR
NJ = len(PARENTS)              # 5 joints
P_POSE = (NJ - 1) * 9          # 36 pose-corrective features


# --------------------------------------------------------------------------------------
# Generation-aware tile sizing
# --------------------------------------------------------------------------------------
def _round_up(x, m):
    return ((x + m - 1) // m) * m


def _tile_config():
    """(max_tv, prefer_even_tile_count, vmem_limit_bytes), picked from the detected VMEM:
    128-MiB parts (v5e/v6e, one TensorCore) get big tiles; 64-MiB parts (v7x, two
    TensorCores sharing the grid) get smaller tiles with an even tile count preferred."""
    vmem = None
    try:
        vmem = getattr(pltpu.get_tpu_info(), "vmem_capacity_bytes", None)
    except Exception:
        vmem = None
    if vmem is not None and vmem >= 100 * 1024 * 1024:
        return 2560, False, 96 * 1024 * 1024      # v5e / v6e class
    if vmem is not None:
        return 1280, True, 48 * 1024 * 1024       # v7x class (64 MiB VMEM, megacore)
    return 1024, True, 48 * 1024 * 1024           # unknown: conservative


def _tile_and_pad(v, max_tv, prefer_even):
    """Pick the lane-tile TV (multiple of 128) and the padded vertex count."""
    v128 = _round_up(v, 128)
    if v128 <= max_tv:
        return v128, v128          # single tile, no pipeline overhead
    best_key, best = None, None
    for tv in range(128, max_tv + 1, 128):
        n = -(-v128 // tv)
        v_pad = n * tv
        waste = v_pad - v128
        odd = (n % 2 == 1) if prefer_even else False
        key = (odd, waste, -tv)    # prefer even tile counts, then less padding, then bigger tiles
        if best_key is None or key < best_key:
            best_key, best = key, (tv, v_pad)
    return best


# --------------------------------------------------------------------------------------
# Fused Pallas kernel: shape+pose blend (MXU) + LBS skinning epilogue (VPU), per V-tile
# --------------------------------------------------------------------------------------
def fused_lbs_kernel(cspf_ref, a12_ref, dirs_ref, w_ref, out_ref):
    """Per V-tile (coordinate-major stripes, vertex axis in lanes):
         v_posed = Cspf @ Dirs              (shape blend + template + pose offsets, one MXU dot)
         T       = sum_j a12[:, j] * w[j]   (12 x TV coefficient rows, pure VPU broadcast FMAs)
         verts   = T_x*vp_x + T_y*vp_y + T_z*vp_z + T_const
       Translation is folded into the const rows of a12 through the appended ones-row of w."""
    v_posed = jnp.dot(cspf_ref[...], dirs_ref[...],
                      preferred_element_type=jnp.float32)          # (3B, TV) f32
    w = w_ref[...]                                                  # (NJ+1, TV) f32
    njp1 = w.shape[0]
    batch = a12_ref.shape[0]
    for b in range(batch):                                          # B is 1 for FLAME
        a = a12_ref[b]                                              # (12, NJ+1) f32
        t = a[:, 0:1] * w[0:1, :]
        for j in range(1, njp1):
            t = t + a[:, j:j + 1] * w[j:j + 1, :]                   # VPU broadcast FMAs
        vp = v_posed[3 * b:3 * b + 3, :]                            # (3, TV)
        out_ref[3 * b:3 * b + 3, :] = (t[0:3] * vp[0:1] + t[3:6] * vp[1:2]
                                       + t[6:9] * vp[2:3] + t[9:12])


def _fused_lbs_call(cspf, a12, dirs, w_ext, *, tv, vmem_limit):
    b3, kc = cspf.shape
    b = a12.shape[0]
    njp1, v_pad = w_ext.shape
    num_tiles = v_pad // tv
    return pl.pallas_call(
        fused_lbs_kernel,
        grid=(num_tiles,),
        in_specs=[
            pl.BlockSpec((b3, kc), lambda i: (0, 0)),          # resident coefficients
            pl.BlockSpec((b, 12, njp1), lambda i: (0, 0, 0)),  # resident joint transforms
            pl.BlockSpec((kc, tv), lambda i: (0, i)),          # streamed dirs (dominant stream)
            pl.BlockSpec((njp1, tv), lambda i: (0, i)),        # streamed skinning weights
        ],
        out_specs=pl.BlockSpec((b3, tv), lambda i: (0, i)),
        out_shape=jax.ShapeDtypeStruct((b3, v_pad), F32),
        compiler_params=pltpu.CompilerParams(
            dimension_semantics=("parallel",),                 # megacore splits tiles on v7x
            vmem_limit_bytes=vmem_limit),
    )(cspf, a12, dirs, w_ext)


# --------------------------------------------------------------------------------------
# One-time parameter prep (constant layout work hoisted out of the forward pass)
# --------------------------------------------------------------------------------------
def prepare_flame_params(params, dirs_dtype=jnp.bfloat16, max_tv=None):
    """Transpose / flatten / pad / quantize the constant FLAME tensors once.  Call at
    model-load time, not per forward."""
    v_template = params["v_template"].astype(F32)        # (V, 3)
    shapedirs = params["shapedirs"].astype(F32)          # (V, 3, NB)
    posedirs_raw = params["posedirs_raw"].astype(F32)    # (P, V, 3)
    J_regressor = params["J_regressor"].astype(F32)      # (NJ, V)
    lbs_weights = params["lbs_weights"].astype(F32)      # (V, NJ)

    V = v_template.shape[0]
    NB = shapedirs.shape[2]
    P = posedirs_raw.shape[0]
    nj = J_regressor.shape[0]

    hw_max_tv, prefer_even, vmem_limit = _tile_config()
    if max_tv is None:
        max_tv = hw_max_tv
    tv, v_pad = _tile_and_pad(V, max_tv, prefer_even)
    pad = v_pad - V

    # Coordinate-major stripes (row k*NB + l), template rows appended as 3 extra "bases".
    sd_flat = jnp.transpose(shapedirs, (1, 2, 0)).reshape(3 * NB, V)     # (3NB, V)
    ds = jnp.concatenate([sd_flat, v_template.T], axis=0)                # (3NB+3, V)
    pd_flat = jnp.transpose(posedirs_raw, (2, 0, 1)).reshape(3 * P, V)   # (3P, V)

    # Precompute Ds @ Jreg^T once (f32) so J = Cs @ dsj is a tiny XLA dot at forward time.
    dsj = jnp.dot(ds, J_regressor.T)                                     # (3NB+3, NJ)

    # Single fused RHS stream for the kernel.
    dirs = jnp.concatenate([ds, pd_flat], axis=0)                        # (3NB+3+3P, V)
    w_ext = jnp.concatenate([lbs_weights.T, jnp.ones((1, V), F32)], 0)   # (NJ+1, V)

    if pad:
        dirs = jnp.pad(dirs, ((0, 0), (0, pad)))
        w_ext = jnp.pad(w_ext, ((0, 0), (0, pad)))

    # TODO(synk): int8 dirs with per-row scales folded into cspf would cut HBM bytes 4x on
    # v5e/v6e 'MXUs (int path); not portable to v7x (fp8-only MXU), so not enabled here.
    dirs = dirs.astype(dirs_dtype)

    return {
        "dirs": dirs, "dsj": dsj, "w_ext": w_ext,
        "lbs_weights": lbs_weights,
        "V": V, "V_pad": v_pad, "TV": tv, "NB": NB, "P": P, "NJ": nj,
        "vmem_limit": vmem_limit,
    }


# --------------------------------------------------------------------------------------
# JAX glue (faithful ports of the small torch helpers)
# --------------------------------------------------------------------------------------
def batch_rodrigues(rot_vecs, eps=1e-8):
    angle = jnp.sqrt(jnp.sum((rot_vecs + eps) ** 2, axis=1, keepdims=True))   # (N,1)
    rot_dir = rot_vecs / angle
    cos = jnp.cos(angle)[:, None, :]
    sin = jnp.sin(angle)[:, None, :]
    rx, ry, rz = rot_dir[:, 0], rot_dir[:, 1], rot_dir[:, 2]
    zeros = jnp.zeros_like(rx)
    K = jnp.stack([zeros, -rz, ry, rz, zeros, -rx, -ry, rx, zeros],
                  axis=1).reshape(-1, 3, 3)
    ident = jnp.eye(3, dtype=rot_vecs.dtype)[None]
    return ident + sin * K + (1.0 - cos) * jnp.matmul(K, K)


def batch_rigid_transform(rot_mats, joints, parents):
    B, nj = joints.shape[:2]
    par = np.array(parents)
    rel_joints = joints.at[:, 1:].add(-joints[:, par[1:]])
    t = rel_joints[..., None]                                   # (B,NJ,3,1)
    top = jnp.concatenate([rot_mats, t], axis=-1)               # (B,NJ,3,4)
    bottom = jnp.broadcast_to(jnp.array([0., 0., 0., 1.], dtype=joints.dtype),
                              (B, nj, 1, 4))
    transforms_mat = jnp.concatenate([top, bottom], axis=-2)    # (B,NJ,4,4)
    chain = [transforms_mat[:, 0]]
    for i in range(1, nj):
        chain.append(jnp.matmul(chain[int(par[i])], transforms_mat[:, i]))
    transforms = jnp.stack(chain, axis=1)
    posed_joints = transforms[:, :, :3, 3]
    joints_h = jnp.concatenate(
        [joints[..., None], jnp.zeros((B, nj, 1, 1), joints.dtype)], axis=2)
    corr = jnp.matmul(transforms, joints_h)                     # (B,NJ,4,1)
    rel_transforms = transforms - jnp.pad(corr, ((0, 0), (0, 0), (0, 0), (3, 0)))
    return posed_joints, rel_transforms


# --------------------------------------------------------------------------------------
# FLAME forward (Pallas path)
# --------------------------------------------------------------------------------------
def flame_forward(prepped, shape_params, expression_params, pose_params, transl=None):
    dirs, dsj, w_ext = prepped["dirs"], prepped["dsj"], prepped["w_ext"]
    V, tv = prepped["V"], prepped["TV"]
    NB, P, nj = prepped["NB"], prepped["P"], prepped["NJ"]

    B = shape_params.shape[0]
    # betas = cat([shape, shape_betas(empty), expr, expr_betas(empty)])
    betas = jnp.concatenate([shape_params, expression_params], axis=1)
    neck_pose = jnp.zeros((B, 3), F32)
    eye_pose = jnp.zeros((B, 6), F32)
    if transl is None:
        transl = jnp.zeros((B, 3), F32)
    full_pose = jnp.concatenate(
        [pose_params[:, :3], neck_pose, pose_params[:, 3:], eye_pose], axis=1)

    rot_mats = batch_rodrigues(full_pose.reshape(-1, 3)).reshape(B, nj, 3, 3)
    pose_feature = (rot_mats[:, 1:] - jnp.eye(3, dtype=F32)).reshape(B, 3 * (nj - 1) * 3)

    # Tiny per-forward coefficient matrices (block-diagonal per coordinate, row = b*3+k).
    eye3 = jnp.eye(3, dtype=F32)
    cs_bs = jnp.einsum("bl,kc->bkcl", betas, eye3).reshape(B * 3, 3 * NB)
    cs_vt = jnp.tile(eye3, (B, 1))                                  # template coefficients
    cs = jnp.concatenate([cs_bs, cs_vt], axis=1)                    # (3B, 3NB+3) f32
    pf3 = jnp.einsum("bp,kc->bkcp", pose_feature, eye3).reshape(B * 3, 3 * P)

    # Joints from the shape blend: J = Cs @ (Ds @ Jreg^T) — tiny f32 XLA dot, so the rigid
    # transforms are ready before the streaming kernel launches.
    j3 = jnp.dot(cs, dsj)                                           # (3B, NJ)
    J = jnp.transpose(j3.reshape(B, 3, nj), (0, 2, 1))              # (B, NJ, 3)

    J_transformed, A = batch_rigid_transform(rot_mats, J, PARENTS)

    # Permute A so rows group x/y/z/const coefficients; fold transl into the const rows
    # via the appended ones-row of w_ext.
    a_perm = jnp.transpose(A[:, :, :3, :], (0, 3, 2, 1)).reshape(B, 12, nj)  # [b, c*3+r, j]
    extra = jnp.concatenate([jnp.zeros((B, 9, 1), F32), transl[:, :, None]], axis=1)
    a12 = jnp.concatenate([a_perm, extra], axis=2)                           # (B, 12, NJ+1)

    # Single fused coefficient block, cast to the dirs storage dtype (bf16 by default).
    cspf = jnp.concatenate([cs, pf3], axis=1).astype(dirs.dtype)             # (3B, KC)

    verts3 = _fused_lbs_call(cspf, a12, dirs, w_ext, tv=tv,
                             vmem_limit=prepped["vmem_limit"])               # (3B, V_pad)
    vertices = jnp.transpose(verts3[:, :V].reshape(B, 3, V), (0, 2, 1))      # (B, V, 3)

    W = jnp.broadcast_to(prepped["lbs_weights"][None], (B, V, nj))
    # TODO(synk): the torch forward also computes barycentric landmarks (vertices2landmarks)
    # and the optional `delta` template offset, but neither is part of the returned tuple /
    # tested path, so they are omitted here.
    return vertices, J_transformed, A, W


# --------------------------------------------------------------------------------------
# Pure-JAX reference (mirrors the torch lbs() math, torch layouts)
# --------------------------------------------------------------------------------------
def flame_reference(params, shape_params, expression_params, pose_params, transl):
    v_template = params["v_template"]
    shapedirs = params["shapedirs"]
    posedirs = params["posedirs_raw"].reshape(params["posedirs_raw"].shape[0], -1)  # (P, V*3)
    J_regressor = params["J_regressor"]
    lbs_weights = params["lbs_weights"]

    B = shape_params.shape[0]
    V = v_template.shape[0]
    betas = jnp.concatenate([shape_params, expression_params], axis=1)
    neck_pose = jnp.zeros((B, 3), F32)
    eye_pose = jnp.zeros((B, 6), F32)
    full_pose = jnp.concatenate(
        [pose_params[:, :3], neck_pose, pose_params[:, 3:], eye_pose], axis=1)

    template = jnp.broadcast_to(v_template[None], (B, V, 3))
    v_shaped = template + jnp.einsum("bl,mkl->bmk", betas, shapedirs)
    J = jnp.einsum("bik,ji->bjk", v_shaped, J_regressor)

    rot_mats = batch_rodrigues(full_pose.reshape(-1, 3)).reshape(B, NJ, 3, 3)
    pose_feature = (rot_mats[:, 1:] - jnp.eye(3, dtype=F32)).reshape(B, -1)
    pose_offsets = jnp.matmul(pose_feature, posedirs).reshape(B, -1, 3)
    v_posed = pose_offsets + v_shaped

    J_transformed, A = batch_rigid_transform(rot_mats, J, PARENTS)
    W = jnp.broadcast_to(lbs_weights[None], (B, V, NJ))
    T = jnp.matmul(W, A.reshape(B, NJ, 16)).reshape(B, V, 4, 4)
    vph = jnp.concatenate([v_posed, jnp.ones((B, V, 1), F32)], axis=2)
    v_homo = jnp.matmul(T, vph[..., None])
    verts = v_homo[:, :, :3, 0] + transl[:, None, :]
    return verts, J_transformed, A, W


# --------------------------------------------------------------------------------------
if __name__ == "__main__":
    key = jax.random.PRNGKey(0)
    ks = jax.random.split(key, 10)

    B = 1          # FLAME module hardcodes batch_size = 1
    V = 1000       # synthetic small mesh (pads to 1024; also exercised with 4 tiles below)
    NB_SHAPE, NB_EXPR = 8, 8

    params = {
        "v_template": 0.1 * jax.random.normal(ks[0], (V, 3), F32),
        "shapedirs": 0.01 * jax.random.normal(ks[1], (V, 3, NB_SHAPE + NB_EXPR), F32),
        "posedirs_raw": 0.01 * jax.random.normal(ks[2], (P_POSE, V, 3), F32),
        "J_regressor": jax.nn.softmax(jax.random.normal(ks[3], (NJ, V), F32), axis=-1),
        "lbs_weights": jax.nn.softmax(2.0 * jax.random.normal(ks[4], (V, NJ), F32),
                                      axis=-1),
    }

    shape_params = jax.random.normal(ks[5], (B, NB_SHAPE), F32)
    expression_params = jax.random.normal(ks[6], (B, NB_EXPR), F32)
    pose_params = 0.3 * jax.random.normal(ks[7], (B, 6), F32)   # global(3) + jaw(3)
    transl = 0.1 * jax.random.normal(ks[8], (B, 3), F32)

    verts_r, J_r, A_r, W_r = flame_reference(params, shape_params, expression_params,
                                             pose_params, transl)

    # --- 1) exact f32 path, forced small tiles: exercises padding + multi-tile grid ------
    prep_f32 = prepare_flame_params(params, dirs_dtype=jnp.float32, max_tv=256)
    verts, J_t, A, W = flame_forward(prep_f32, shape_params, expression_params,
                                     pose_params, transl)
    jax.block_until_ready((verts, J_t, A, W))
    np.testing.assert_allclose(np.asarray(verts), np.asarray(verts_r), rtol=1e-4, atol=1e-4)
    np.testing.assert_allclose(np.asarray(J_t), np.asarray(J_r), rtol=1e-4, atol=1e-4)
    np.testing.assert_allclose(np.asarray(A), np.asarray(A_r), rtol=1e-4, atol=1e-4)
    np.testing.assert_allclose(np.asarray(W), np.asarray(W_r), rtol=1e-4, atol=1e-4)
    assert verts.shape == (B, V, 3) and J_t.shape == (B, NJ, 3)
    assert A.shape == (B, NJ, 4, 4) and W.shape == (B, V, NJ)

    # --- 2) default fast path: bf16 dirs stream, hardware-sized tiles --------------------
    prep_bf16 = prepare_flame_params(params)      # one-time layout/quantization prep
    verts16, J_t16, A16, W16 = flame_forward(prep_bf16, shape_params, expression_params,
                                             pose_params, transl)
    jax.block_until_ready((verts16, J_t16, A16, W16))
    # Vertices stream through bf16 dirs (f32 accumulation): looser tolerance.
    np.testing.assert_allclose(np.asarray(verts16), np.asarray(verts_r),
                               rtol=3e-3, atol=3e-3)
    # Joints / transforms / weights stay on the f32 path: tight tolerance.
    np.testing.assert_allclose(np.asarray(J_t16), np.asarray(J_r), rtol=1e-4, atol=1e-4)
    np.testing.assert_allclose(np.asarray(A16), np.asarray(A_r), rtol=1e-4, atol=1e-4)
    np.testing.assert_allclose(np.asarray(W16), np.asarray(W_r), rtol=1e-4, atol=1e-4)
    assert verts16.shape == (B, V, 3)

    print("KERNEL_OK")
</pallas_src>

<mosaic_0001>
module attributes {stable_mosaic.version = 11 : i64} {
  func.func @fused_lbs_kernel(%arg0: i32, %arg1: memref<3x159xf32, #tpu.memory_space<vmem>>, %arg2: memref<1x12x6xf32, #tpu.memory_space<vmem>>, %arg3: memref<159x256xf32, #tpu.memory_space<vmem>>, %arg4: memref<6x256xf32, #tpu.memory_space<vmem>>, %arg5: memref<3x256xf32, #tpu.memory_space<vmem>>) attributes {dimension_semantics = [#tpu.dimension_semantics<parallel>], iteration_bounds = array<i64: 4>, scalar_prefetch = 0 : i64, scratch_operands = 0 : i64, tpu.core_type = #tpu.core_type<tc>, window_params = [{pipeline_mode = #tpu.pipeline_mode<synchronous>, transform_indices = @transform_0, window_bounds = array<i64: 3, 159>}, {pipeline_mode = #tpu.pipeline_mode<synchronous>, transform_indices = @transform_1, window_bounds = array<i64: 1, 12, 6>}, {transform_indices = @transform_2, window_bounds = array<i64: 159, 256>}, {transform_indices = @transform_3, window_bounds = array<i64: 6, 256>}, {transform_indices = @transform_4, window_bounds = array<i64: 3, 256>}]} {
    %c0 = arith.constant 0 : index
    %c0_0 = arith.constant 0 : index
    %0 = vector.load %arg1[%c0, %c0_0] : memref<3x159xf32, #tpu.memory_space<vmem>>, vector<3x159xf32>
    %c0_1 = arith.constant 0 : index
    %c0_2 = arith.constant 0 : index
    %1 = vector.load %arg3[%c0_1, %c0_2] : memref<159x256xf32, #tpu.memory_space<vmem>>, vector<159x256xf32>
    %cst = arith.constant dense<0.000000e+00> : vector<3x256xf32>
    %2 = tpu.matmul %0, %1, %cst {dimension_numbers = #tpu.dot_dimension_numbers<[1], [0], [0], [1], [0, 0, 1, 1], [], []>} : vector<3x159xf32>, vector<159x256xf32>, vector<3x256xf32> -> vector<3x256xf32>
    %c0_3 = arith.constant 0 : index
    %c0_4 = arith.constant 0 : index
    %3 = vector.load %arg4[%c0_3, %c0_4] : memref<6x256xf32, #tpu.memory_space<vmem>>, vector<6x256xf32>
    %c0_5 = arith.constant 0 : index
    %c0_6 = arith.constant 0 : index
    %c0_7 = arith.constant 0 : index
    %4 = vector.load %arg2[%c0_5, %c0_6, %c0_7] : memref<1x12x6xf32, #tpu.memory_space<vmem>>, vector<1x12x6xf32>
    %5 = vector.shape_cast %4 : vector<1x12x6xf32> to vector<12x6xf32>
    %6 = vector.extract_strided_slice %5 {offsets = [0, 0], sizes = [12, 1], strides = [1, 1]} : vector<12x6xf32> to vector<12x1xf32>
    %7 = vector.extract_strided_slice %3 {offsets = [0, 0], sizes = [1, 256], strides = [1, 1]} : vector<6x256xf32> to vector<1x256xf32>
    %8 = vector.broadcast %6 : vector<12x1xf32> to vector<12x256xf32>
    %9 = vector.broadcast %7 : vector<1x256xf32> to vector<12x256xf32>
    %10 = arith.mulf %8, %9 : vector<12x256xf32>
    %11 = vector.extract_strided_slice %5 {offsets = [0, 1], sizes = [12, 1], strides = [1, 1]} : vector<12x6xf32> to vector<12x1xf32>
    %12 = vector.extract_strided_slice %3 {offsets = [1, 0], sizes = [1, 256], strides = [1, 1]} : vector<6x256xf32> to vector<1x256xf32>
    %13 = vector.broadcast %11 : vector<12x1xf32> to vector<12x256xf32>
    %14 = vector.broadcast %12 : vector<1x256xf32> to vector<12x256xf32>
    %15 = arith.mulf %13, %14 : vector<12x256xf32>
    %16 = arith.addf %10, %15 : vector<12x256xf32>
    %17 = vector.extract_strided_slice %5 {offsets = [0, 2], sizes = [12, 1], strides = [1, 1]} : vector<12x6xf32> to vector<12x1xf32>
    %18 = vector.extract_strided_slice %3 {offsets = [2, 0], sizes = [1, 256], strides = [1, 1]} : vector<6x256xf32> to vector<1x256xf32>
    %19 = vector.broadcast %17 : vector<12x1xf32> to vector<12x256xf32>
    %20 = vector.broadcast %18 : vector<1x256xf32> to vector<12x256xf32>
    %21 = arith.mulf %19, %20 : vector<12x256xf32>
    %22 = arith.addf %16, %21 : vector<12x256xf32>
    %23 = vector.extract_strided_slice %5 {offsets = [0, 3], sizes = [12, 1], strides = [1, 1]} : vector<12x6xf32> to vector<12x1xf32>
    %24 = vector.extract_strided_slice %3 {offsets = [3, 0], sizes = [1, 256], strides = [1, 1]} : vector<6x256xf32> to vector<1x256xf32>
    %25 = vector.broadcast %23 : vector<12x1xf32> to vector<12x256xf32>
    %26 = vector.broadcast %24 : vector<1x256xf32> to vector<12x256xf32>
    %27 = arith.mulf %25, %26 : vector<12x256xf32>
    %28 = arith.addf %22, %27 : vector<12x256xf32>
    %29 = vector.extract_strided_slice %5 {offsets = [0, 4], sizes = [12, 1], strides = [1, 1]} : vector<12x6xf32> to vector<12x1xf32>
    %30 = vector.extract_strided_slice %3 {offsets = [4, 0], sizes = [1, 256], strides = [1, 1]} : vector<6x256xf32> to vector<1x256xf32>
    %31 = vector.broadcast %29 : vector<12x1xf32> to vector<12x256xf32>
    %32 = vector.broadcast %30 : vector<1x256xf32> to vector<12x256xf32>
    %33 = arith.mulf %31, %32 : vector<12x256xf32>
    %34 = arith.addf %28, %33 : vector<12x256xf32>
    %35 = vector.extract_strided_slice %5 {offsets = [0, 5], sizes = [12, 1], strides = [1, 1]} : vector<12x6xf32> to vector<12x1xf32>
    %36 = vector.extract_strided_slice %3 {offsets = [5, 0], sizes = [1, 256], strides = [1, 1]} : vector<6x256xf32> to vector<1x256xf32>
    %37 = vector.broadcast %35 : vector<12x1xf32> to vector<12x256xf32>
    %38 = vector.broadcast %36 : vector<1x256xf32> to vector<12x256xf32>
    %39 = arith.mulf %37, %38 : vector<12x256xf32>
    %40 = arith.addf %34, %39 : vector<12x256xf32>
    %41 = vector.extract_strided_slice %40 {offsets = [0, 0], sizes = [3, 256], strides = [1, 1]} : vector<12x256xf32> to vector<3x256xf32>
    %42 = vector.extract_strided_slice %2 {offsets = [0, 0], sizes = [1, 256], strides = [1, 1]} : vector<3x256xf32> to vector<1x256xf32>
    %43 = vector.broadcast %42 : vector<1x256xf32> to vector<3x256xf32>
    %44 = arith.mulf %41, %43 : vector<3x256xf32>
    %45 = vector.extract_strided_slice %40 {offsets = [3, 0], sizes = [3, 256], strides = [1, 1]} : vector<12x256xf32> to vector<3x256xf32>
    %46 = vector.extract_strided_slice %2 {offsets = [1, 0], sizes = [1, 256], strides = [1, 1]} : vector<3x256xf32> to vector<1x256xf32>
    %47 = vector.broadcast %46 : vector<1x256xf32> to vector<3x256xf32>
    %48 = arith.mulf %45, %47 : vector<3x256xf32>
    %49 = arith.addf %44, %48 : vector<3x256xf32>
    %50 = vector.extract_strided_slice %40 {offsets = [6, 0], sizes = [3, 256], strides = [1, 1]} : vector<12x256xf32> to vector<3x256xf32>
    %51 = vector.extract_strided_slice %2 {offsets = [2, 0], sizes = [1, 256], strides = [1, 1]} : vector<3x256xf32> to vector<1x256xf32>
    %52 = vector.broadcast %51 : vector<1x256xf32> to vector<3x256xf32>
    %53 = arith.mulf %50, %52 : vector<3x256xf32>
    %54 = arith.addf %49, %53 : vector<3x256xf32>
    %55 = vector.extract_strided_slice %40 {offsets = [9, 0], sizes = [3, 256], strides = [1, 1]} : vector<12x256xf32> to vector<3x256xf32>
    %56 = arith.addf %54, %55 : vector<3x256xf32>
    %c0_8 = arith.constant 0 : index
    %c0_9 = arith.constant 0 : index
    %57 = vector.load %arg5[%c0_8, %c0_9] : memref<3x256xf32, #tpu.memory_space<vmem>>, vector<3x256xf32>
    tpu.vector_store %arg5[%c0_8, %c0_9], %56 {strides = array<i32>} : memref<3x256xf32, #tpu.memory_space<vmem>>, vector<3x256xf32>,
    return
  }
  func.func @transform_0(%arg0: i32) -> (i32, i32) {
    %c0_i32 = arith.constant 0 : i32
    %c0_i32_0 = arith.constant 0 : i32
    %c0_i32_1 = arith.constant 0 : i32
    return %c0_i32, %c0_i32_0 : i32, i32
  }
  func.func @transform_1(%arg0: i32) -> (i32, i32, i32) {
    %c0_i32 = arith.constant 0 : i32
    %c0_i32_0 = arith.constant 0 : i32
    %c0_i32_1 = arith.constant 0 : i32
    %c0_i32_2 = arith.constant 0 : i32
    return %c0_i32, %c0_i32_0, %c0_i32_1 : i32, i32, i32
  }
  func.func @transform_2(%arg0: i32) -> (i32, i32) {
    %c0_i32 = arith.constant 0 : i32
    %c0_i32_0 = arith.constant 0 : i32
    return %c0_i32, %arg0 : i32, i32
  }
  func.func @transform_3(%arg0: i32) -> (i32, i32) {
    %c0_i32 = arith.constant 0 : i32
    %c0_i32_0 = arith.constant 0 : i32
    return %c0_i32, %arg0 : i32, i32
  }
  func.func @transform_4(%arg0: i32) -> (i32, i32) {
    %c0_i32 = arith.constant 0 : i32
    %c0_i32_0 = arith.constant 0 : i32
    return %c0_i32, %arg0 : i32, i32
  }
}

</mosaic_0001>

<llo_original>
// kernel: tpu_custom_call.1
$region0: #{tpu_custom_call.1}
  #allocation0 [shape = 'u32[]', space=smem, size = 0x4, offset = 0x4, fixed_abs, tag = 'smem constant byte address 0x4 - core index']
  #allocation1 [shape = 'u32[144,128]{1,0:T(1,128)}', space=vmem, size = 0x12000, scoped, tag = 'internal scratch']
  %s0 = inlined_call_operand.vmem [shape: f32[3,159], index: 0, kind: input, shape index: {}]
  %s1 = inlined_call_operand.vmem [shape: f32[1,12,6], index: 1, kind: input, shape index: {}]
  %s2 = inlined_call_operand.hbm [shape: f32[159,1024], index: 2, kind: input, shape index: {}]
  %s3 = inlined_call_operand.hbm [shape: f32[6,1024], index: 3, kind: input, shape index: {}]
  %s4 = inlined_call_operand.hbm [shape: f32[3,1024], index: 4, kind: output, shape index: {}]
  %s5 = sld [smem:[#allocation0]]
  $region57: #{tpu_custom_call.1} parent=0
    _
  %s7 = ssub.s32 1, %s5
  %s8 = scalar_select 0, %s7, %s5
  $region1: #{tpu_custom_call.1} parent=0
    #allocation2 [shape = 'u8[327680]{0}', space=vmem, size = 0x50000, scoped, tag = 'input window, operand 2']
    #allocation3 [shape = 's32[2]{0}', space=sflag, size = 0x8, scoped, tag = 'scoped memory for tpu_custom_call.1']
    #allocation4 [shape = 's32[2]{0}', space=sflag, size = 0x8, scoped, tag = 'scoped memory for tpu_custom_call.1']
    #allocation5 [shape = 'u8[16384]{0}', space=vmem, size = 0x4000, scoped, tag = 'input window, operand 3']
    #allocation6 [shape = 's32[2]{0}', space=sflag, size = 0x8, scoped, tag = 'scoped memory for tpu_custom_call.1']
    #allocation7 [shape = 'u8[8192]{0}', space=vmem, size = 0x2000, scoped, tag = 'output window, operand 0']
    %9 = vsyncpa [#allocation3], 0
    %s10 = scalar_lea.sflag [#allocation3], 1
    %11 = vsyncpa %s10, 0
    %12 = vsyncpa [#allocation6], 0
    %s13 = scalar_lea.sflag [#allocation6], 1
    %14 = vsyncpa %s13, 0
    %15 = vsyncpa [#allocation4], 0
    %s16 = scalar_lea.sflag [#allocation4], 1
    %17 = vsyncpa %s16, 0
    loop: start=0, step=1, limit=6
    $region2: #{tpu_custom_call.1} parent=1 // loop_pre_header
      _
    $region3: #{tpu_custom_call.1} parent=1 // loop_header
      %s19 = sphi 0, %s23
      %p20 = scmp.ge.s32.totalorder %s19, 6
      %s27 = sphi 0, %s27
      %s29 = sphi 0, %s27
      %s30 = sphi 0, %s29
      %s44 = sphi 0, %s30
      %s48 = sphi 0, %s48
      %s50 = sphi 0, %s48
      %s51 = sphi 0, %s50
      %s65 = sphi 0, %s51
      %s71 = sphi 0, %s73
      %s74 = sphi 0, %s71
      %s75 = sphi 0, %s74
      %s91 = sphi 0, %s75
      %s97 = sphi 0, %s99
      %s100 = sphi 0, %s97
      %s101 = sphi 0, %s100
      %s117 = sphi 0, %s101
      %s123 = sphi 0, %s125
      %s126 = sphi 0, %s123
      %s127 = sphi 0, %s126
      %s143 = sphi 0, %s127
    $region4: #{tpu_custom_call.1} parent=1 // loop_header_branch
      %22 = sbr.rel (%p20) target = $region8
    $region5: #{tpu_custom_call.1} parent=1 // loop_body
      %s24 = ssub.s32 %s19, 1
      %s25 = ssub.s32 %s19, 2
      %s26 = sadd.s32 %s19, 1
      %s28 = sadd.s32 %s27, 1
      %p31 = scmp.eq.s32.totalorder %s19, 3
      %p32 = scmp.ne.s32.totalorder %s27, %s29
      %p33 = scmp.eq.s32.totalorder %s19, 0
      %p34 = por %p32, %p33
      %p35 = scmp.ne.s32.totalorder %s27, %s29
      %p36 = scmp.eq.s32.totalorder %s24, 3
      %p37 = por %p35, %p36
      %p38 = scmp.ne.s32.totalorder %s29, %s30
      %p39 = scmp.eq.s32.totalorder %s24, 0
      %p40 = por %p38, %p39
      %p41 = scmp.ne.s32.totalorder %s29, %s30
      %p42 = scmp.eq.s32.totalorder %s25, 3
      %p43 = por %p41, %p42
      %p45 = scmp.ne.s32.totalorder %s30, %s44
      %p46 = scmp.eq.s32.totalorder %s25, 0
      %p47 = por %p45, %p46
      %s49 = sadd.s32 %s48, 1
      %p52 = scmp.eq.s32.totalorder %s19, 3
      %p53 = scmp.ne.s32.totalorder %s48, %s50
      %p54 = scmp.eq.s32.totalorder %s19, 0
      %p55 = por %p53, %p54
      %p56 = scmp.ne.s32.totalorder %s48, %s50
      %p57 = scmp.eq.s32.totalorder %s24, 3
      %p58 = por %p56, %p57
      %p59 = scmp.ne.s32.totalorder %s50, %s51
      %p60 = scmp.eq.s32.totalorder %s24, 0
      %p61 = por %p59, %p60
      %p62 = scmp.ne.s32.totalorder %s50, %s51
      %p63 = scmp.eq.s32.totalorder %s25, 3
      %p64 = por %p62, %p63
      %p66 = scmp.ne.s32.totalorder %s51, %s65
      %p67 = scmp.eq.s32.totalorder %s25, 0
      %p68 = por %p66, %p67
      %s69 = ssub.s32 %s19, %s26
      %p70 = scmp.eq.s32.totalorder %s69, 0
      %s72 = sadd.s32 %s71, 1
      %s73 = scalar_select %p70, %s71, %s72
      %p76 = pneg %p70
      %p77 = scmp.eq.s32.totalorder %s19, 3
      %p78 = por %p76, %p77
      %p79 = scmp.ne.s32.totalorder %s71, %s74
      %p80 = scmp.eq.s32.totalorder %s19, 0
      %p81 = por %p79, %p80
      %p82 = scmp.ne.s32.totalorder %s71, %s74
      %p83 = scmp.eq.s32.totalorder %s24, 3
      %p84 = por %p82, %p83
      %p85 = scmp.ne.s32.totalorder %s74, %s75
      %p86 = scmp.eq.s32.totalorder %s24, 0
      %p87 = por %p85, %p86
      %p88 = scmp.ne.s32.totalorder %s74, %s75
      %p89 = scmp.eq.s32.totalorder %s25, 3
      %p90 = por %p88, %p89
      %p92 = scmp.ne.s32.totalorder %s75, %s91
      %p93 = scmp.eq.s32.totalorder %s25, 0
      %p94 = por %p92, %p93
      %s95 = ssub.s32 %s19, %s26
      %p96 = scmp.eq.s32.totalorder %s95, 0
      %s98 = sadd.s32 %s97, 1
      %s99 = scalar_select %p96, %s97, %s98
      %p102 = pneg %p96
      %p103 = scmp.eq.s32.totalorder %s19, 3
      %p104 = por %p102, %p103
      %p105 = scmp.ne.s32.totalorder %s97, %s100
      %p106 = scmp.eq.s32.totalorder %s19, 0
      %p107 = por %p105, %p106
      %p108 = scmp.ne.s32.totalorder %s97, %s100
      %p109 = scmp.eq.s32.totalorder %s24, 3
      %p110 = por %p108, %p109
      %p111 = scmp.ne.s32.totalorder %s100, %s101
      %p112 = scmp.eq.s32.totalorder %s24, 0
      %p113 = por %p111, %p112
      %p114 = scmp.ne.s32.totalorder %s100, %s101
      %p115 = scmp.eq.s32.totalorder %s25, 3
      %p116 = por %p114, %p115
      %p118 = scmp.ne.s32.totalorder %s101, %s117
      %p119 = scmp.eq.s32.totalorder %s25, 0
      %p120 = por %p118, %p119
      %s121 = ssub.s32 %s19, %s26
      %p122 = scmp.eq.s32.totalorder %s121, 0
      %s124 = sadd.s32 %s123, 1
      %s125 = scalar_select %p122, %s123, %s124
      %p128 = pneg %p122
      %p129 = scmp.eq.s32.totalorder %s19, 3
      %p130 = por %p128, %p129
      %p131 = scmp.ne.s32.totalorder %s123, %s126
      %p132 = scmp.eq.s32.totalorder %s19, 0
      %p133 = por %p131, %p132
      %p134 = scmp.ne.s32.totalorder %s123, %s126
      %p135 = scmp.eq.s32.totalorder %s24, 3
      %p136 = por %p134, %p135
      %p137 = scmp.ne.s32.totalorder %s126, %s127
      %p138 = scmp.eq.s32.totalorder %s24, 0
      %p139 = por %p137, %p138
      %p140 = scmp.ne.s32.totalorder %s126, %s127
      %p141 = scmp.eq.s32.totalorder %s25, 3
      %p142 = por %p140, %p141
      %p144 = scmp.ne.s32.totalorder %s127, %s143
      %p145 = scmp.eq.s32.totalorder %s25, 0
      %p146 = por %p144, %p145
      %p147 = scmp.le.s32.totalorder 1, %s19
      %p148 = scmp.lt.s32.totalorder %s19, 5
      %p149 = pnand %p147, %p148
      %p150 = pneg %p149
      // Predicated region
      $region9: #{tpu_custom_call.1} parent=5 // pred_check
        _
      $region10: #{tpu_custom_call.1} parent=5 // pred_check_branch
        %152 = sbr.rel (%p149) target = $region12
      $region11: #{tpu_custom_call.1} parent=5 // pred_region
        %s153 = ssub.s32 %s19, 1
        // Predicated region
        $region13: #{tpu_custom_call.1} parent=11 // pred_check
          %p154 = pneg %p40
        $region14: #{tpu_custom_call.1} parent=11 // pred_check_branch
          %156 = sbr.rel (%p154) target = $region16
        $region15: #{tpu_custom_call.1} parent=11 // pred_region
          _
        $region16: #{tpu_custom_call.1} parent=11 // pred_fallthru
          _
        // Predicated region
        $region17: #{tpu_custom_call.1} parent=11 // pred_check
          %p157 = pneg %p61
        $region18: #{tpu_custom_call.1} parent=11 // pred_check_branch
          %159 = sbr.rel (%p157) target = $region20
        $region19: #{tpu_custom_call.1} parent=11 // pred_region
          _
        $region20: #{tpu_custom_call.1} parent=11 // pred_fallthru
          _
      $region12: #{tpu_custom_call.1} parent=5 // pred_fallthru
        _
      %p160 = scmp.lt.s32.totalorder %s19, 4
      // Predicated region
      $region21: #{tpu_custom_call.1} parent=5 // pred_check
        %p161 = pneg %p160
      $region22: #{tpu_custom_call.1} parent=5 // pred_check_branch
        %163 = sbr.rel (%p161) target = $region24
      $region23: #{tpu_custom_call.1} parent=5 // pred_region
        // Predicated region
        $region25: #{tpu_custom_call.1} parent=23 // pred_check
          %p164 = pneg %p81
        $region26: #{tpu_custom_call.1} parent=23 // pred_check_branch
          %166 = sbr.rel (%p164) target = $region28
        $region27: #{tpu_custom_call.1} parent=23 // pred_region
          %s167 = sand.u32 %s71, 1
          %s168 = scalar_lea.sflag [#allocation3], %s167
          %s169 = sand.u32 %s71, 1
          %s170 = smul.addr %s169, 320
          %s171 = scalar_lea.vmem [#allocation2], %s170
          %s172 = smul.u32 2, %s19
          %s174 = ssub.s32 5120, 5120
          %175 = vsyncadd %s168, %s174
          %s176 = smul.addr %s172, 128
          %s177 = scalar_lea.hbm %s2, %s176
          %s178 = sshll.u32 %s171, 4
          %s179 = int_to_ptr.vmem [resolvable:$true] %s178
          %184 = dma.hbm_to_vmem [thread:$0]  %s177, 5120, %s179, %s168, 1024, 256, 16
        $region28: #{tpu_custom_call.1} parent=23 // pred_fallthru
          _
        // Predicated region
        $region29: #{tpu_custom_call.1} parent=23 // pred_check
          %p185 = pneg %p107
        $region30: #{tpu_custom_call.1} parent=23 // pred_check_branch
          %187 = sbr.rel (%p185) target = $region32
        $region31: #{tpu_custom_call.1} parent=23 // pred_region
          %s188 = sand.u32 %s97, 1
          %s189 = scalar_lea.sflag [#allocation6], %s188
          %s190 = sand.u32 %s97, 1
          %s191 = smul.addr %s190, 16
          %s192 = scalar_lea.vmem [#allocation5], %s191
          %s193 = smul.u32 2, %s19
          %s195 = ssub.s32 256, 256
          %196 = vsyncadd %s189, %s195
          %s197 = smul.addr %s193, 128
          %s198 = scalar_lea.hbm %s3, %s197
          %s200 = sshll.u32 %s192, 4
          %s201 = int_to_ptr.vmem [resolvable:$true] %s200
          %203 = dma.hbm_to_vmem [thread:$0]  %s198, 256, %s201, %s189
        $region32: #{tpu_custom_call.1} parent=23 // pred_fallthru
          _
      $region24: #{tpu_custom_call.1} parent=5 // pred_fallthru
        _
      %p204 = scmp.le.s32.totalorder 1, %s19
      %p205 = scmp.lt.s32.totalorder %s19, 5
      %p206 = pnand %p204, %p205
      %p207 = pneg %p206
      // Predicated region
      $region33: #{tpu_custom_call.1} parent=5 // pred_check
        _
      $region34: #{tpu_custom_call.1} parent=5 // pred_check_branch
        %209 = sbr.rel (%p206) target = $region36
      $region35: #{tpu_custom_call.1} parent=5 // pred_region
        %s210 = ssub.s32 %s19, 1
        %s211 = sand.u32 %s74, 1
        %s212 = scalar_lea.sflag [#allocation3], %s211
        %s213 = sand.u32 %s74, 1
        %s214 = smul.addr %s213, 320
        %s215 = scalar_lea.vmem [#allocation2], %s214
        // Predicated region
        $region37: #{tpu_custom_call.1} parent=35 // pred_check
          %p216 = pneg %p87
        $region38: #{tpu_custom_call.1} parent=35 // pred_check_branch
          %218 = sbr.rel (%p216) target = $region40
        $region39: #{tpu_custom_call.1} parent=35 // pred_region
          %219 = dma.done %s212, 5120
        $region40: #{tpu_custom_call.1} parent=35 // pred_fallthru
          _
        %s220 = sand.u32 %s100, 1
        %s221 = scalar_lea.sflag [#allocation6], %s220
        %s222 = sand.u32 %s100, 1
        %s223 = smul.addr %s222, 16
        %s224 = scalar_lea.vmem [#allocation5], %s223
        // Predicated region
        $region41: #{tpu_custom_call.1} parent=35 // pred_check
          %p225 = pneg %p113
        $region42: #{tpu_custom_call.1} parent=35 // pred_check_branch
          %227 = sbr.rel (%p225) target = $region44
        $region43: #{tpu_custom_call.1} parent=35 // pred_region
          %228 = dma.done %s221, 256
        $region44: #{tpu_custom_call.1} parent=35 // pred_fallthru
          _
        %p229 = pneg %p40
        %p230 = pneg %p37
        %p231 = pneg %p61
        %p232 = pneg %p58
        %s233 = sand.u32 %s74, 1
        %s234 = scalar_lea.sflag [#allocation3], %s233
        %s235 = sand.u32 %s74, 1
        %s236 = smul.addr %s235, 320
        %s237 = scalar_lea.vmem [#allocation2], %s236
        %p238 = pneg %p87
        %p239 = pneg %p84
        %s240 = sand.u32 %s100, 1
        %s241 = scalar_lea.sflag [#allocation6], %s240
        %s242 = sand.u32 %s100, 1
        %s243 = smul.addr %s242, 16
        %s244 = scalar_lea.vmem [#allocation5], %s243
        %p245 = pneg %p113
        %p246 = pneg %p110
        %p247 = pneg %p139
        %p248 = pneg %p136
        %s249 = sand.u32 %s126, 1
        %s250 = scalar_lea.sflag [#allocation4], %s249
        %s251 = sand.u32 %s126, 1
        %s252 = smul.addr %s251, 8
        %s253 = scalar_lea.vmem [#allocation7], %s252
        %s254 = smul.u32 2, %s24
        %s255 = smul.u32 2, %s24
        %s256 = smul.u32 2, %s24
        %v257 = vld [vmem:[%s0] sm:$0x77]
        %v258 = vld [vmem:[%s215] sm:$0xff]
        %v259 = vld [vmem:[%s215 + $0x8] sm:$0xff]
        %v260 = vld [vmem:[%s215 + $0x10] sm:$0xff]
        %v261 = vld [vmem:[%s215 + $0x18] sm:$0xff]
        %v262 = vld [vmem:[%s215 + $0x20] sm:$0xff]
        %v263 = vld [vmem:[%s215 + $0x28] sm:$0xff]
        %v264 = vld [vmem:[%s215 + $0x30] sm:$0xff]
        %v265 = vld [vmem:[%s215 + $0x38] sm:$0xff]
        %v266 = vld [vmem:[%s215 + $0x40] sm:$0xff]
        %v267 = vld [vmem:[%s215 + $0x48] sm:$0xff]
        %v268 = vld [vmem:[%s215 + $0x50] sm:$0xff]
        %v269 = vld [vmem:[%s215 + $0x58] sm:$0xff]
        %v270 = vld [vmem:[%s215 + $0x60] sm:$0xff]
        %v271 = vld [vmem:[%s215 + $0x68] sm:$0xff]
        %v272 = vld [vmem:[%s215 + $0x70] sm:$0xff]
        %v273 = vld [vmem:[%s215 + $0x78] sm:$0xff]
        %v274 = vld [vmem:[%s215 + $0x80] sm:$0xff]
        %v275 = vld [vmem:[%s215 + $0x88] sm:$0xff]
        %v276 = vld [vmem:[%s215 + $0x90] sm:$0xff]
        %v277 = vld [vmem:[%s215 + $0x98] sm:$0xff]
        %v278 = vld [vmem:[%s215 + $0xa0] sm:$0xff]
        %v279 = vld [vmem:[%s215 + $0xa8] sm:$0xff]
        %v280 = vld [vmem:[%s215 + $0xb0] sm:$0xff]
        %v281 = vld [vmem:[%s215 + $0xb8] sm:$0xff]
        %v282 = vld [vmem:[%s215 + $0xc0] sm:$0xff]
        %v283 = vld [vmem:[%s215 + $0xc8] sm:$0xff]
        %v284 = vld [vmem:[%s215 + $0xd0] sm:$0xff]
        %v285 = vld [vmem:[%s215 + $0xd8] sm:$0xff]
        %v286 = vld [vmem:[%s215 + $0xe0] sm:$0xff]
        %v287 = vld [vmem:[%s215 + $0xe8] sm:$0xff]
        %v288 = vld [vmem:[%s215 + $0xf0] sm:$0xff]
        %v289 = vld [vmem:[%s215 + $0xf8] sm:$0xff]
        %v290 = vld [vmem:[%s215 + $0x100] sm:$0xff]
        %v291 = vld [vmem:[%s215 + $0x108] sm:$0xff]
        %v292 = vld [vmem:[%s215 + $0x110] sm:$0xff]
        %v293 = vld [vmem:[%s215 + $0x118] sm:$0xff]
        %v294 = vld [vmem:[%s215 + $0x120] sm:$0xff]
        %v295 = vld [vmem:[%s215 + $0x128] sm:$0xff]
        %v296 = vld [vmem:[%s215 + $0x130] sm:$0x7f]
        %v297 = vld [vmem:[%s215 + $0x138] sm:$0x7f]
        %v299 = vcombine.high %v257, %v257
        %vm300 = vcmask 252928
        %v301 = vsel %vm300, %v299, 0
        %vm303 = vcmask 1046528
        %v305 = vsel %vm303, %v296, 0
        %v308 = vsel %vm303, %v297, 0
        %310 = vmatprep.subr.mxu0 %v259
        %311 = vmatpush1.msra.mxu0 %v258
        %312 = vmatprep.subr.mxu0 %v261
        %313 = vmatpush1.msra.mxu0 %v260
        %314 = vmatprep.subr.mxu0 %v263
        %315 = vmatpush1.msra.mxu0 %v262
        %316 = vmatprep.subr.mxu0 %v265
        %317 = vmatpush1.msra.mxu0 %v264
        %318 = vmatprep.subr.mxu0 %v267
        %319 = vmatpush1.msra.mxu0 %v266
        %320 = vmatprep.subr.mxu0 %v269
        %321 = vmatpush1.msra.mxu0 %v268
        %322 = vmatprep.subr.mxu0 %v271
        %323 = vmatpush1.msra.mxu0 %v270
        %324 = vmatprep.subr.mxu0 %v273
        %325 = vmatpush1.msra.mxu0 %v272
        %326 = vmatprep.subr.mxu0 %v275
        %327 = vmatpush1.msra.mxu0 %v274
        %328 = vmatprep.subr.mxu0 %v277
        %329 = vmatpush1.msra.mxu0 %v276
        %330 = vmatprep.subr.mxu0 %v279
        %331 = vmatpush1.msra.mxu0 %v278
        %332 = vmatprep.subr.mxu0 %v281
        %333 = vmatpush1.msra.mxu0 %v280
        %334 = vmatprep.subr.mxu0 %v283
        %335 = vmatpush1.msra.mxu0 %v282
        %336 = vmatprep.subr.mxu0 %v285
        %337 = vmatpush1.msra.mxu0 %v284
        %338 = vmatprep.subr.mxu0 %v287
        %339 = vmatpush1.msra.mxu0 %v286
        %340 = vmatprep.subr.mxu0 %v289
        %341 = vmatpush1.msra.mxu0 %v288
        %342 = vmatprep.subr.mxu0 %v291
        %343 = vmatpush1.msra.mxu0 %v290
        %344 = vmatprep.subr.mxu0 %v293
        %345 = vmatpush1.msra.mxu0 %v292
        %346 = vmatprep.subr.mxu0 %v295
        %347 = vmatpush1.msra.mxu0 %v294
        %348 = vmatprep.subr.mxu0 %v308
        %349 = vmatpush1.msra.mxu0 %v305
        %350 = vmatprep.subr.mxu0 0.0
        %351 = vmatpush1.msra.mxu0 0.0
        %352 = vmatprep.subr.mxu0 0.0
        %353 = vmatpush1.msra.mxu0 0.0
        %354 = vmatprep.subr.mxu0 0.0
        %355 = vmatpush1.msra.mxu0 0.0
        %356 = vmatprep.subr.mxu0 0.0
        %357 = vmatpush1.msra.mxu0 0.0
        %358 = vmatprep.subr.mxu0 0.0
        %359 = vmatpush1.msra.mxu0 0.0
        %360 = vmatprep.subr.mxu0 0.0
        %361 = vmatpush1.msra.mxu0 0.0
        %362 = vmatprep.subr.mxu0 0.0
        %363 = vmatpush1.msra.mxu0 0.0
        %364 = vmatprep.subr.mxu0 0.0
        %365 = vmatpush1.msra.mxu0 0.0
        %366 = vmatprep.subr.mxu0 0.0
        %367 = vmatpush1.msra.mxu0 0.0
        %368 = vmatprep.subr.mxu0 0.0
        %369 = vmatpush1.msra.mxu0 0.0
        %370 = vmatprep.subr.mxu0 0.0
        %371 = vmatpush1.msra.mxu0 0.0
        %372 = vmatprep.subr.mxu0 0.0
        %373 = vmatpush1.msra.mxu0 0.0
        %374 = vmatprep.mubr.f32.mxu0 %v301
        %375 = vmatmul.mubr.f32.gmra.mrb[0].mxu0 %v257
        %v376 = vpop.f32.mrb[0].mxu0
        %v377 = vadd.f32 0.0, %v376
        %v378 = vpop.f32.mrb[0].mxu0
        %v379 = vadd.f32 0.0, %v378
        %380 = vdwg.mxu0
        %v381 = vld [vmem:[%s224] sm:$0x3f]
        %v382 = vld [vmem:[%s224 + $0x8] sm:$0x3f]
        %v383 = vld [vmem:[%s1] sm:$0xff]
        %v384 = vld [vmem:[%s1 + $0x8] sm:$0xf]
        %386 = vset.pattern.permute.xlu0 0
        %387 = vperm.xlu0 %386, %v383
        %v388 = vpop.permute.xlu0 %387
        %391 = vset.pattern.permute.xlu0 0
        %392 = vperm.xlu0 %391, %v384
        %v393 = vpop.permute.xlu0 %392
        %v395 = vlaneseq
        %v396 = vshrl.u32 %v395, 7
        %v397 = vsub.s32 0, %v396
        %v398 = vrot.slane %v381, %v397
        %v399 = vlaneseq
        %v400 = vshrl.u32 %v399, 7
        %v401 = vsub.s32 0, %v400
        %v402 = vrot.slane %v382, %v401
        %v403 = vmul.f32 %v388, %v398
        %v404 = vmul.f32 %v388, %v402
        %v405 = vmul.f32 %v393, %v398
        %v406 = vmul.f32 %v393, %v402
        %407 = vset.pattern.permute.xlu0 1
        %408 = vperm.xlu0 %407, %v383
        %v409 = vpop.permute.xlu0 %408
        %411 = vset.pattern.permute.xlu0 1
        %412 = vperm.xlu0 %411, %v384
        %v413 = vpop.permute.xlu0 %412
        %v415 = vlaneseq
        %v416 = vshrl.u32 %v415, 7
        %v417 = vsub.s32 1, %v416
        %v418 = vrot.slane %v381, %v417
        %v419 = vlaneseq
        %v420 = vshrl.u32 %v419, 7
        %v421 = vsub.s32 1, %v420
        %v422 = vrot.slane %v382, %v421
        %v423 = vmul.f32 %v409, %v418
        %v424 = vmul.f32 %v409, %v422
        %v425 = vmul.f32 %v413, %v418
        %v426 = vmul.f32 %v413, %v422
        %v427 = vadd.f32 %v403, %v423
        %v428 = vadd.f32 %v404, %v424
        %v429 = vadd.f32 %v405, %v425
        %v430 = vadd.f32 %v406, %v426
        %431 = vset.pattern.permute.xlu0 2
        %432 = vperm.xlu0 %431, %v383
        %v433 = vpop.permute.xlu0 %432
        %435 = vset.pattern.permute.xlu0 2
        %436 = vperm.xlu0 %435, %v384
        %v437 = vpop.permute.xlu0 %436
        %v439 = vlaneseq
        %v440 = vshrl.u32 %v439, 7
        %v441 = vsub.s32 2, %v440
        %v442 = vrot.slane %v381, %v441
        %v443 = vlaneseq
        %v444 = vshrl.u32 %v443, 7
        %v445 = vsub.s32 2, %v444
        %v446 = vrot.slane %v382, %v445
        %v447 = vmul.f32 %v433, %v442
        %v448 = vmul.f32 %v433, %v446
        %v449 = vmul.f32 %v437, %v442
        %v450 = vmul.f32 %v437, %v446
        %v451 = vadd.f32 %v427, %v447
        %v452 = vadd.f32 %v428, %v448
        %v453 = vadd.f32 %v429, %v449
        %v454 = vadd.f32 %v430, %v450
        %455 = vset.pattern.permute.xlu0 3
        %456 = vperm.xlu0 %455, %v383
        %v457 = vpop.permute.xlu0 %456
        %459 = vset.pattern.permute.xlu0 3
        %460 = vperm.xlu0 %459, %v384
        %v461 = vpop.permute.xlu0 %460
        %v463 = vlaneseq
        %v464 = vshrl.u32 %v463, 7
        %v465 = vsub.s32 3, %v464
        %v466 = vrot.slane %v381, %v465
        %v467 = vlaneseq
        %v468 = vshrl.u32 %v467, 7
        %v469 = vsub.s32 3, %v468
        %v470 = vrot.slane %v382, %v469
        %v471 = vmul.f32 %v457, %v466
        %v472 = vmul.f32 %v457, %v470
        %v473 = vmul.f32 %v461, %v466
        %v474 = vmul.f32 %v461, %v470
        %v475 = vadd.f32 %v451, %v471
        %v476 = vadd.f32 %v452, %v472
        %v477 = vadd.f32 %v453, %v473
        %v478 = vadd.f32 %v454, %v474
        %479 = vset.pattern.permute.xlu0 4
        %480 = vperm.xlu0 %479, %v383
        %v481 = vpop.permute.xlu0 %480
        %483 = vset.pattern.permute.xlu0 4
        %484 = vperm.xlu0 %483, %v384
        %v485 = vpop.permute.xlu0 %484
        %v487 = vlaneseq
        %v488 = vshrl.u32 %v487, 7
        %v489 = vsub.s32 4, %v488
        %v490 = vrot.slane %v381, %v489
        %v491 = vlaneseq
        %v492 = vshrl.u32 %v491, 7
        %v493 = vsub.s32 4, %v492
        %v494 = vrot.slane %v382, %v493
        %v495 = vmul.f32 %v481, %v490
        %v496 = vmul.f32 %v481, %v494
        %v497 = vmul.f32 %v485, %v490
        %v498 = vmul.f32 %v485, %v494
        %v499 = vadd.f32 %v475, %v495
        %v500 = vadd.f32 %v476, %v496
        %v501 = vadd.f32 %v477, %v497
        %v502 = vadd.f32 %v478, %v498
        %503 = vset.pattern.permute.xlu0 5
        %504 = vperm.xlu0 %503, %v383
        %v505 = vpop.permute.xlu0 %504
        %507 = vset.pattern.permute.xlu0 5
        %508 = vperm.xlu0 %507, %v384
        %v509 = vpop.permute.xlu0 %508
        %v511 = vlaneseq
        %v512 = vshrl.u32 %v511, 7
        %v513 = vsub.s32 5, %v512
        %v514 = vrot.slane %v381, %v513
        %v515 = vlaneseq
        %v516 = vshrl.u32 %v515, 7
        %v517 = vsub.s32 5, %v516
        %v518 = vrot.slane %v382, %v517
        %v519 = vmul.f32 %v505, %v514
        %v520 = vmul.f32 %v505, %v518
        %v521 = vmul.f32 %v509, %v514
        %v522 = vmul.f32 %v509, %v518
        %v523 = vadd.f32 %v499, %v519
        %v524 = vadd.f32 %v500, %v520
        %v525 = vadd.f32 %v501, %v521
        %v526 = vadd.f32 %v502, %v522
        %v527 = vlaneseq
        %v528 = vshrl.u32 %v527, 7
        %v529 = vsub.s32 0, %v528
        %v530 = vrot.slane %v377, %v529
        %v531 = vlaneseq
        %v532 = vshrl.u32 %v531, 7
        %v533 = vsub.s32 0, %v532
        %v534 = vrot.slane %v379, %v533
        %v535 = vmul.f32 %v523, %v530
        %v536 = vmul.f32 %v524, %v534
        %v537 = vlaneseq
        %v538 = vshrl.u32 %v537, 7
        %v539 = vsub.s32 1, %v538
        %v540 = vrot.slane %v377, %v539
        %v541 = vlaneseq
        %v542 = vshrl.u32 %v541, 7
        %v543 = vsub.s32 1, %v542
        %v544 = vrot.slane %v379, %v543
        %v545 = vmul.f32 %v523, %v540
        %v546 = vmul.f32 %v524, %v544
        %v549 = vrot.slane %v545, 3
        %v550 = vrot.slane %v546, 3
        %v553 = vadd.f32 %v535, %v549
        %v554 = vadd.f32 %v536, %v550
        %v555 = vlaneseq
        %v556 = vshrl.u32 %v555, 7
        %v557 = vsub.s32 2, %v556
        %v558 = vrot.slane %v377, %v557
        %v559 = vlaneseq
        %v560 = vshrl.u32 %v559, 7
        %v561 = vsub.s32 2, %v560
        %v562 = vrot.slane %v379, %v561
        %v563 = vmul.f32 %v523, %v558
        %v564 = vmul.f32 %v524, %v562
        %v565 = vmul.f32 %v525, %v558
        %v566 = vmul.f32 %v526, %v562
        %vm571 = vcmask 1041408
        %v572 = vrot.slane %v563, 6
        %v573 = vrot.slane %v565, 6
        %v574 = vsel %vm571, %v572, %v573
        %v575 = vrot.slane %v564, 6
        %v576 = vrot.slane %v566, 6
        %v577 = vsel %vm571, %v575, %v576
        %v580 = vadd.f32 %v553, %v574
        %v581 = vadd.f32 %v554, %v577
        %v584 = vrot.slane %v525, 1
        %v585 = vrot.slane %v526, 1
        %v588 = vadd.f32 %v580, %v584
        %v589 = vadd.f32 %v581, %v585
        %v592 = vcombine.low %v588, %v589
        %594 = vst [vmem:[%s253] sm:$0x77] %v592
        %s595 = sand.u32 %s126, 1
        %s596 = scalar_lea.sflag [#allocation4], %s595
        %s597 = sand.u32 %s126, 1
        %s598 = smul.addr %s597, 8
        %s599 = scalar_lea.vmem [#allocation7], %s598
        // Predicated region
        $region45: #{tpu_custom_call.1} parent=35 // pred_check
          %p600 = pneg %p136
        $region46: #{tpu_custom_call.1} parent=35 // pred_check_branch
          %602 = sbr.rel (%p600) target = $region48
        $region47: #{tpu_custom_call.1} parent=35 // pred_region
          %s603 = smul.u32 2, %s24
          %s605 = ssub.s32 128, 128
          %606 = vsyncadd %s596, %s605
          %s607 = smul.addr %s603, 64
          %s608 = scalar_lea.hbm %s4, %s607
          %s610 = sshll.u32 %s599, 4
          %s611 = int_to_ptr.vmem [resolvable:$true] %s610
          %613 = dma.vmem_to_hbm [thread:$0]  %s611, 128, %s608, %s596
        $region48: #{tpu_custom_call.1} parent=35 // pred_fallthru
          _
      $region36: #{tpu_custom_call.1} parent=5 // pred_fallthru
        _
      %p614 = scmp.le.s32.totalorder 2, %s19
      // Predicated region
      $region49: #{tpu_custom_call.1} parent=5 // pred_check
        %p615 = pneg %p614
      $region50: #{tpu_custom_call.1} parent=5 // pred_check_branch
        %617 = sbr.rel (%p615) target = $region52
      $region51: #{tpu_custom_call.1} parent=5 // pred_region
        %s618 = ssub.s32 %s19, 2
        // Predicated region
        $region53: #{tpu_custom_call.1} parent=51 // pred_check
          %p619 = pneg %p142
        $region54: #{tpu_custom_call.1} parent=51 // pred_check_branch
          %621 = sbr.rel (%p619) target = $region56
        $region55: #{tpu_custom_call.1} parent=51 // pred_region
          %s622 = sand.u32 %s127, 1
          %s623 = scalar_lea.sflag [#allocation4], %s622
          %s624 = sand.u32 %s127, 1
          %s625 = smul.addr %s624, 8
          %s626 = scalar_lea.vmem [#allocation7], %s625
          %627 = dma.done %s623, 128
        $region56: #{tpu_custom_call.1} parent=51 // pred_fallthru
          _
      $region52: #{tpu_custom_call.1} parent=5 // pred_fallthru
        _
    $region6: #{tpu_custom_call.1} parent=1 // loop_footer
      %s23 = sadd.s32 1, %s19
    $region7: #{tpu_custom_call.1} parent=1 // loop_footer_branch
      %18 = sbr.rel target = $region3
    $region8: #{tpu_custom_call.1} parent=1 // loop_exit
      _
    %628 = vsyncpa [#allocation3], 1
    %s629 = scalar_lea.sflag [#allocation3], 1
    %630 = vsyncpa %s629, 1
    %631 = vsyncpa [#allocation6], 1
    %s632 = scalar_lea.sflag [#allocation6], 1
    %633 = vsyncpa %s632, 1
    %634 = vsyncpa [#allocation4], 1
    %s635 = scalar_lea.sflag [#allocation4], 1
    %636 = vsyncpa %s635, 1

</llo_original>
